<compile_context>
chip_gen: v7x
topology: tpu7x:2x2x1
jax: 0.10.0
libtpu: 0.0.40
codegen_flags: <defaults>
</compile_context>

<pallas_src>
import functools

import numpy as np
import jax
import jax.numpy as jnp
from jax.experimental import pallas as pl
from jax.experimental.pallas import tpu as pltpu


_LANE = 128


@functools.lru_cache(maxsize=None)
def _vmem_limit_bytes():
    """Generation-aware VMEM budget (~70% of physical, capped)."""
    try:
        cap = int(pltpu.get_tpu_info().vmem_capacity_bytes)
    except Exception:
        cap = 128 * 1024 * 1024
    return int(min(cap * 0.7, 100 * 1024 * 1024))


def _round_up(x, m):
    return (x + m - 1) // m * m


def _pick_row_tile(m, max_rows=512):
    """Row tile: multiple of 8, capped at 512 (fits v7x's 64 MiB VMEM)."""
    if m <= max_rows:
        return _round_up(max(m, 8), 8)
    return max_rows


def _pad2d(a, rows, cols, dtype):
    r, c = a.shape
    return jnp.pad(a, ((0, rows - r), (0, cols - c))).astype(dtype)


def _pad_bias(b, cols):
    return jnp.pad(b, (0, cols - b.shape[0])).reshape(1, cols).astype(jnp.float32)


def _fold_bn(gamma, beta, mean, var, eps=1e-5):
    scale = gamma / jnp.sqrt(var + eps)
    bias = beta - mean * scale
    return scale, bias


# ----------------------------- Pallas kernels ------------------------------

def _mm_bias_relu_kernel(x_ref, w_ref, b_ref, o_ref):
    # out = relu(x @ w_scaled + bias)        (BN scale pre-folded into w)
    acc = jnp.dot(x_ref[...], w_ref[...], preferred_element_type=jnp.float32)
    o_ref[...] = jnp.maximum(acc + b_ref[...], 0.0).astype(o_ref.dtype)


def _mm_bias_add_relu_kernel(x_ref, w_ref, b_ref, r_ref, o_ref):
    # out = relu(x @ w_scaled + bias + residual)   (residual is bf16, upcast here)
    acc = jnp.dot(x_ref[...], w_ref[...], preferred_element_type=jnp.float32)
    acc = acc + b_ref[...] + r_ref[...].astype(jnp.float32)
    o_ref[...] = jnp.maximum(acc, 0.0).astype(o_ref.dtype)


def _conv3x3_tap_kernel(x_hbm, w_ref, b_ref, o_ref, xbuf, sem,
                        *, tm, halo, wp, dil):
    # 3x3 conv (stride=1) over the flattened, spatially-padded activation.
    # Double-buffered manual DMA of the row tile + halo; nine shifted MXU
    # matmuls accumulate into a local f32 value; fused bias + ReLU epilogue.
    i = pl.program_id(0)
    n_steps = pl.num_programs(0)
    rows = tm + halo
    slot = i % 2

    def _fetch(step, into):
        start = pl.multiple_of(step * tm, 8)
        pltpu.make_async_copy(x_hbm.at[pl.ds(start, rows), :],
                              xbuf.at[into], sem.at[into]).start()

    @pl.when(i == 0)
    def _():
        _fetch(i, slot)                       # prime the pipeline

    # Wait for this tile's activation window (issued by the previous grid
    # step, or by the priming fetch above when i == 0).
    pltpu.make_async_copy(x_hbm.at[pl.ds(0, rows), :],
                          xbuf.at[slot], sem.at[slot]).wait()

    @pl.when(i + 1 < n_steps)
    def _():
        _fetch(i + 1, 1 - slot)               # prefetch next tile; overlaps matmuls

    xv = xbuf.at[slot]
    acc = None
    for k in range(9):                        # unrolled tap loop, local accumulator
        off = (k // 3) * dil * wp + (k % 3) * dil   # static shift within the window
        part = jnp.dot(xv[off:off + tm, :], w_ref[k],
                       preferred_element_type=jnp.float32)
        acc = part if acc is None else acc + part
    o_ref[...] = jnp.maximum(acc + b_ref[...], 0.0).astype(o_ref.dtype)


# ---------------------------- pallas_call wrappers --------------------------

def _fused_matmul_bias_relu(x, w, b, *, tm, out_dtype, residual=None):
    """x:(M,K) bf16, w:(K,N) bf16 (BN-scaled, VMEM-resident), b:(1,N) f32,
       residual:(M,N) bf16 (optional)."""
    m, k = x.shape
    _, n_out = w.shape
    assert m % tm == 0 and n_out % _LANE == 0 and k % _LANE == 0
    grid = (m // tm,)
    x_spec = pl.BlockSpec((tm, k), lambda i: (i, 0))
    w_spec = pl.BlockSpec((k, n_out), lambda i: (0, 0))      # resident weight
    b_spec = pl.BlockSpec((1, n_out), lambda i: (0, 0))      # resident bias
    o_spec = pl.BlockSpec((tm, n_out), lambda i: (i, 0))
    params = pltpu.CompilerParams(
        dimension_semantics=("parallel",),
        vmem_limit_bytes=_vmem_limit_bytes())
    out_bytes = jnp.dtype(out_dtype).itemsize
    flops = int(2 * m * k * n_out)
    bytes_accessed = int(m * k * 2 + k * n_out * 2 + n_out * 4
                         + m * n_out * out_bytes)
    if residual is None:
        return pl.pallas_call(
            _mm_bias_relu_kernel,
            out_shape=jax.ShapeDtypeStruct((m, n_out), out_dtype),
            grid=grid,
            in_specs=[x_spec, w_spec, b_spec],
            out_specs=o_spec,
            compiler_params=params,
            cost_estimate=pl.CostEstimate(flops=flops, transcendentals=0,
                                          bytes_accessed=bytes_accessed),
        )(x, w, b)
    r_spec = pl.BlockSpec((tm, n_out), lambda i: (i, 0))
    bytes_accessed += int(m * n_out * residual.dtype.itemsize)
    return pl.pallas_call(
        _mm_bias_add_relu_kernel,
        out_shape=jax.ShapeDtypeStruct((m, n_out), out_dtype),
        grid=grid,
        in_specs=[x_spec, w_spec, b_spec, r_spec],
        out_specs=o_spec,
        compiler_params=params,
        cost_estimate=pl.CostEstimate(flops=flops, transcendentals=0,
                                      bytes_accessed=bytes_accessed),
    )(x, w, b, residual)


def _conv3x3_fused(xflat, w_taps, bias, *, tm, halo, wp, dil, out_rows):
    """xflat:(out_rows+halo, C) bf16 flattened padded activation (left in HBM),
       w_taps:(9, C, C) bf16 (BN-scaled), bias:(1, C) f32."""
    c = xflat.shape[1]
    assert xflat.shape[0] == out_rows + halo
    assert halo >= 2 * dil * wp + 2 * dil and halo % 8 == 0
    assert tm % 8 == 0 and out_rows % tm == 0 and c % _LANE == 0
    kernel = functools.partial(_conv3x3_tap_kernel,
                               tm=tm, halo=halo, wp=wp, dil=dil)
    flops = int(2 * 9 * out_rows * c * c)
    bytes_accessed = int((out_rows + halo) * c * 2 + 9 * c * c * 2
                         + out_rows * c * 2)
    return pl.pallas_call(
        kernel,
        out_shape=jax.ShapeDtypeStruct((out_rows, c), jnp.bfloat16),
        grid=(out_rows // tm,),
        in_specs=[pl.BlockSpec(memory_space=pl.ANY),             # manual halo DMA
                  pl.BlockSpec((9, c, c), lambda i: (0, 0, 0)),   # resident taps
                  pl.BlockSpec((1, c), lambda i: (0, 0))],
        out_specs=pl.BlockSpec((tm, c), lambda i: (i, 0)),
        scratch_shapes=[pltpu.VMEM((2, tm + halo, c), jnp.bfloat16),
                        pltpu.SemaphoreType.DMA((2,))],
        compiler_params=pltpu.CompilerParams(
            # 'arbitrary': steps run in order, so prefetching step i+1's halo
            # window during step i is valid.
            dimension_semantics=("arbitrary",),
            vmem_limit_bytes=_vmem_limit_bytes()),
        cost_estimate=pl.CostEstimate(flops=flops, transcendentals=0,
                                      bytes_accessed=bytes_accessed),
    )(xflat, w_taps, bias)


# ------------------------------- forward pass -------------------------------

def bottleneck_forward(x_nchw, p, stride=1, dilation=1):
    """Pallas implementation of Bottleneck.forward (downsample=None, groups=1)."""
    assert stride == 1, "downsample=None requires stride=1 for the residual"
    # NCHW -> NHWC once, in bf16; the padded slab below doubles as the
    # stage-3 residual (upcast to f32 inside the kernel).
    x = jnp.transpose(x_nchw.astype(jnp.bfloat16), (0, 2, 3, 1))
    n, h, w, cin = x.shape
    width, out_c = p["width"], p["out_c"]
    assert cin == out_c, "residual needs inplanes == planes*4 (no downsample)"

    cin_p = _round_up(cin, _LANE)
    cw_p = _round_up(width, _LANE)
    co_p = _round_up(out_c, _LANE)
    assert cin_p == co_p

    # Fold BN (inference) scale into the conv weights; keep the bias separate.
    s1, b1 = _fold_bn(p["bn1_gamma"], p["bn1_beta"], p["bn1_mean"], p["bn1_var"])
    s2, b2 = _fold_bn(p["bn2_gamma"], p["bn2_beta"], p["bn2_mean"], p["bn2_var"])
    s3, b3 = _fold_bn(p["bn3_gamma"], p["bn3_beta"], p["bn3_mean"], p["bn3_var"])

    w1 = p["w1"][:, :, 0, 0].T * s1[None, :]                            # (Cin, width)
    w1p = _pad2d(w1, cin_p, cw_p, jnp.bfloat16)
    b1p = _pad_bias(b1, cw_p)

    w2 = jnp.transpose(p["w2"], (2, 3, 1, 0)).reshape(9, width, width)  # tap-major
    w2 = w2 * s2[None, None, :]
    w2p = jnp.pad(w2, ((0, 0), (0, cw_p - width), (0, cw_p - width))
                  ).astype(jnp.bfloat16)
    b2p = _pad_bias(b2, cw_p)

    w3 = p["w3"][:, :, 0, 0].T * s3[None, :]                            # (width, out_c)
    w3p = _pad2d(w3, cw_p, co_p, jnp.bfloat16)
    b3p = _pad_bias(b3, co_p)

    m = n * h * w
    tm = _pick_row_tile(m)
    mp = _round_up(m, tm)

    # ---- stage 1: 1x1 conv + bn1 + relu (row-tiled matmul, resident W) ----
    x2d = _pad2d(x.reshape(m, cin), mp, cin_p, jnp.bfloat16)
    y1 = _fused_matmul_bias_relu(x2d, w1p, b1p, tm=tm, out_dtype=jnp.bfloat16)

    # ---- stage 2: 3x3 conv + bn2 + relu (9-tap accumulation, no im2col) ----
    d = dilation
    hp = h + 2 * d
    wp = _round_up(w + 2 * d, 8)        # sublane-aligned row stride for tap shifts
    y1_img = y1[:m].reshape(n, h, w, cw_p)
    y1_pad = jnp.pad(y1_img, ((0, 0), (d, hp - h - d), (d, wp - w - d), (0, 0)))
    m2 = n * hp * wp
    tm2 = _pick_row_tile(m2)
    m2p = _round_up(m2, tm2)
    halo = _round_up(2 * d * wp + 2 * d, 8)
    # The flat sliding window crosses image-row / batch boundaries, but those
    # outputs land outside the [:, :h, :w, :] valid slice below, and the tail
    # zero padding (m2p + halo - m2 rows) covers the last tile's halo DMA.
    x2 = jnp.pad(y1_pad.reshape(m2, cw_p), ((0, m2p + halo - m2), (0, 0)))
    y2 = _conv3x3_fused(x2, w2p, b2p, tm=tm2, halo=halo, wp=wp, dil=d,
                        out_rows=m2p)
    # Valid conv outputs sit in the top-left (H, W) corner of the padded domain.
    y2 = y2[:m2].reshape(n, hp, wp, cw_p)[:, :h, :w, :].reshape(m, cw_p)

    # ---- stage 3: 1x1 conv + bn3 + residual add + relu (resident W) ----
    x3 = _pad2d(y2, mp, cw_p, jnp.bfloat16)
    y3 = _fused_matmul_bias_relu(x3, w3p, b3p, tm=tm, out_dtype=jnp.float32,
                                 residual=x2d)          # reuse bf16 input slab

    out = y3[:m, :out_c].reshape(n, h, w, out_c)
    return jnp.transpose(out, (0, 3, 1, 2))                              # NCHW


# ------------------------------ parameters ----------------------------------

def make_bottleneck_params(key, inplanes, planes, base_width=64, groups=1):
    """Deterministic synthetic parameters matching Bottleneck.__init__ shapes."""
    width = int(planes * (base_width / 64.0)) * groups
    out_c = planes * 4  # expansion = 4
    ks = jax.random.split(key, 12)
    f32 = jnp.float32
    p = {}
    # conv weights (PyTorch layout: (Cout, Cin, kh, kw))
    p["w1"] = 0.1 * jax.random.normal(ks[0], (width, inplanes, 1, 1), f32)
    p["w2"] = 0.1 * jax.random.normal(ks[1], (width, width, 3, 3), f32)
    p["w3"] = 0.1 * jax.random.normal(ks[2], (out_c, width, 1, 1), f32)
    # BN params (inference mode)
    for i, c in zip((1, 2, 3), (width, width, out_c)):
        p[f"bn{i}_gamma"] = 1.0 + 0.1 * jax.random.normal(ks[2 + i * 3 - 2], (c,), f32)
        p[f"bn{i}_beta"] = 0.1 * jax.random.normal(ks[2 + i * 3 - 1], (c,), f32)
        p[f"bn{i}_mean"] = 0.1 * jax.random.normal(ks[2 + i * 3], (c,), f32)
        p[f"bn{i}_var"] = 1.0 + 0.1 * jnp.abs(
            jax.random.normal(jax.random.fold_in(key, 100 + i), (c,), f32))
    p["width"], p["out_c"] = width, out_c
    return p


# ------------------------------ JAX reference --------------------------------

def _reference_forward(x_nchw, p, stride=1, dilation=1):
    def conv(x, w, stride, padding, dilation):
        return jax.lax.conv_general_dilated(
            x, w, window_strides=(stride, stride),
            padding=[(padding, padding), (padding, padding)],
            rhs_dilation=(dilation, dilation),
            dimension_numbers=("NCHW", "OIHW", "NCHW"),
            precision=jax.lax.Precision.HIGHEST)

    def bn(x, g, b, m, v, eps=1e-5):
        shp = (1, -1, 1, 1)
        return (x - m.reshape(shp)) / jnp.sqrt(v.reshape(shp) + eps) \
            * g.reshape(shp) + b.reshape(shp)

    relu = lambda t: jnp.maximum(t, 0.0)
    out = relu(bn(conv(x_nchw, p["w1"], 1, 0, 1),
                  p["bn1_gamma"], p["bn1_beta"], p["bn1_mean"], p["bn1_var"]))
    out = relu(bn(conv(out, p["w2"], stride, dilation, dilation),
                  p["bn2_gamma"], p["bn2_beta"], p["bn2_mean"], p["bn2_var"]))
    out = bn(conv(out, p["w3"], 1, 0, 1),
             p["bn3_gamma"], p["bn3_beta"], p["bn3_mean"], p["bn3_var"])
    return relu(out + x_nchw)


# ---------------------------------- main -------------------------------------

if __name__ == "__main__":
    key = jax.random.PRNGKey(0)
    k_x, k_p = jax.random.split(key)

    # Small shapes: batch=2, inplanes=16 (== planes*4, so the residual adds
    # with downsample=None), H=W=16, planes=4 (width=4, out=16).
    inplanes, planes = 16, 4
    x = jax.random.normal(k_x, (2, inplanes, 16, 16), jnp.float32)
    params = make_bottleneck_params(k_p, inplanes, planes)

    out = jax.block_until_ready(bottleneck_forward(x, params))

    ref = jax.block_until_ready(_reference_forward(x, params))
    # bf16 MXU inputs / inter-stage activations / residual (f32 accumulation)
    # => compare against the f32 reference with a bf16-level tolerance.
    np.testing.assert_allclose(np.asarray(out), np.asarray(ref),
                               rtol=5e-2, atol=5e-2)
    print("KERNEL_OK")
</pallas_src>

<mosaic_0001>
module attributes {stable_mosaic.version = 11 : i64} {
  func.func @_mm_bias_relu_kernel(%arg0: i32, %arg1: memref<512x128xbf16, #tpu.memory_space<vmem>>, %arg2: memref<128x128xbf16, #tpu.memory_space<vmem>>, %arg3: memref<1x128xf32, #tpu.memory_space<vmem>>, %arg4: memref<512x128xbf16, #tpu.memory_space<vmem>>) attributes {dimension_semantics = [#tpu.dimension_semantics<parallel>], iteration_bounds = array<i64: 1>, scalar_prefetch = 0 : i64, scratch_operands = 0 : i64, tpu.core_type = #tpu.core_type<tc>, window_params = [{transform_indices = @transform_0, window_bounds = array<i64: 512, 128>}, {pipeline_mode = #tpu.pipeline_mode<synchronous>, transform_indices = @transform_1, window_bounds = array<i64: 128, 128>}, {pipeline_mode = #tpu.pipeline_mode<synchronous>, transform_indices = @transform_2, window_bounds = array<i64: 1, 128>}, {transform_indices = @transform_3, window_bounds = array<i64: 512, 128>}]} {
    %c0 = arith.constant 0 : index
    %c0_0 = arith.constant 0 : index
    %0 = vector.load %arg1[%c0, %c0_0] : memref<512x128xbf16, #tpu.memory_space<vmem>>, vector<512x128xbf16>
    %c0_1 = arith.constant 0 : index
    %c0_2 = arith.constant 0 : index
    %1 = vector.load %arg2[%c0_1, %c0_2] : memref<128x128xbf16, #tpu.memory_space<vmem>>, vector<128x128xbf16>
    %cst = arith.constant dense<0.000000e+00> : vector<512x128xf32>
    %2 = tpu.matmul %0, %1, %cst {dimension_numbers = #tpu.dot_dimension_numbers<[1], [0], [0], [1], [0, 0, 1, 1], [], []>} : vector<512x128xbf16>, vector<128x128xbf16>, vector<512x128xf32> -> vector<512x128xf32>
    %c0_3 = arith.constant 0 : index
    %c0_4 = arith.constant 0 : index
    %3 = vector.load %arg3[%c0_3, %c0_4] : memref<1x128xf32, #tpu.memory_space<vmem>>, vector<1x128xf32>
    %4 = vector.broadcast %3 : vector<1x128xf32> to vector<512x128xf32>
    %5 = arith.addf %2, %4 : vector<512x128xf32>
    %cst_5 = arith.constant 0.000000e+00 : f32
    %6 = vector.broadcast %cst_5 : f32 to vector<512x128xf32>
    %7 = arith.maximumf %5, %6 : vector<512x128xf32>
    %8 = arith.truncf %7 : vector<512x128xf32> to vector<512x128xbf16>
    %c0_6 = arith.constant 0 : index
    %c0_7 = arith.constant 0 : index
    %9 = vector.load %arg4[%c0_6, %c0_7] : memref<512x128xbf16, #tpu.memory_space<vmem>>, vector<512x128xbf16>
    tpu.vector_store %arg4[%c0_6, %c0_7], %8 {strides = array<i32>} : memref<512x128xbf16, #tpu.memory_space<vmem>>, vector<512x128xbf16>,
    return
  }
  func.func @transform_0(%arg0: i32) -> (i32, i32) {
    %c0_i32 = arith.constant 0 : i32
    %c0_i32_0 = arith.constant 0 : i32
    return %arg0, %c0_i32 : i32, i32
  }
  func.func @transform_1(%arg0: i32) -> (i32, i32) {
    %c0_i32 = arith.constant 0 : i32
    %c0_i32_0 = arith.constant 0 : i32
    %c0_i32_1 = arith.constant 0 : i32
    return %c0_i32, %c0_i32_0 : i32, i32
  }
  func.func @transform_2(%arg0: i32) -> (i32, i32) {
    %c0_i32 = arith.constant 0 : i32
    %c0_i32_0 = arith.constant 0 : i32
    %c0_i32_1 = arith.constant 0 : i32
    return %c0_i32, %c0_i32_0 : i32, i32
  }
  func.func @transform_3(%arg0: i32) -> (i32, i32) {
    %c0_i32 = arith.constant 0 : i32
    %c0_i32_0 = arith.constant 0 : i32
    return %arg0, %c0_i32 : i32, i32
  }
}

</mosaic_0001>

<llo_original>
// kernel: tpu_custom_call.1
$region0: #{tpu_custom_call.1}
  #allocation0 [shape = 'u32[]', space=smem, size = 0x4, offset = 0x4, fixed_abs, tag = 'smem constant byte address 0x4 - core index']
  #allocation1 [shape = 'u32[144,128]{1,0:T(1,128)}', space=vmem, size = 0x12000, scoped, tag = 'internal scratch']
  %s0 = inlined_call_operand.hbm [shape: bf16[512,128], index: 0, kind: input, shape index: {}]
  %s1 = inlined_call_operand.hbm [shape: bf16[128,128], index: 1, kind: input, shape index: {}]
  %s2 = inlined_call_operand.hbm [shape: f32[1,128], index: 2, kind: input, shape index: {}]
  %s3 = inlined_call_operand.hbm [shape: bf16[512,128], index: 3, kind: output, shape index: {}]
  %s4 = sld [smem:[#allocation0]]
  $region34: #{tpu_custom_call.1} parent=0
    _
  %s6 = ssub.s32 1, %s4
  %s7 = scalar_select 0, %s6, %s4
  $region1: #{tpu_custom_call.1} parent=0
    #allocation2 [shape = 'u8[131072]{0}', space=vmem, size = 0x20000, scoped, tag = 'input window, operand 0, single buffered']
    #allocation3 [shape = 's32[1]{0}', space=sflag, size = 0x4, scoped, tag = 'scoped memory for tpu_custom_call.1']
    #allocation4 [shape = 's32[1]{0}', space=sflag, size = 0x4, scoped, tag = 'scoped memory for tpu_custom_call.1']
    #allocation5 [shape = 'u8[32768]{0}', space=vmem, size = 0x8000, scoped, tag = 'input window, operand 1, single buffered']
    #allocation6 [shape = 's32[1]{0}', space=sflag, size = 0x4, scoped, tag = 'scoped memory for tpu_custom_call.1']
    #allocation7 [shape = 'u8[512]{0}', space=vmem, size = 0x400, scoped, tag = 'input window, operand 2, single buffered']
    #allocation8 [shape = 'u8[131072]{0}', space=vmem, size = 0x20000, scoped, tag = 'output window, operand 0, single buffered']
    %8 = vsyncpa [#allocation3], 0
    %9 = vsyncpa [#allocation6], 0
    %10 = vsyncpa [#allocation4], 0
    // Predicated region
    $region2: #{tpu_custom_call.1} parent=1 // pred_check
      _
    $region3: #{tpu_custom_call.1} parent=1 // pred_check_branch
      %12 = sbr.rel (0) target = $region5
    $region4: #{tpu_custom_call.1} parent=1 // pred_region
      %s14 = ssub.s32 4096, 4096
      %15 = vsyncadd [#allocation3], %s14
      %s16 = sshll.u32 [#allocation2], 4
      %s17 = int_to_ptr.vmem [resolvable:$true] %s16
      %22 = dma.hbm_to_vmem [thread:$0]  %s0, 4096, %s17, [#allocation3], 64, 64, 4
    $region5: #{tpu_custom_call.1} parent=1 // pred_fallthru
      _
    // Predicated region
    $region6: #{tpu_custom_call.1} parent=1 // pred_check
      _
    $region7: #{tpu_custom_call.1} parent=1 // pred_check_branch
      %24 = sbr.rel (0) target = $region9
    $region8: #{tpu_custom_call.1} parent=1 // pred_region
      %s26 = ssub.s32 1024, 1024
      %27 = vsyncadd [#allocation6], %s26
      %s28 = sshll.u32 [#allocation5], 4
      %s29 = int_to_ptr.vmem [resolvable:$true] %s28
      %34 = dma.hbm_to_vmem [thread:$0]  %s1, 1024, %s29, [#allocation6], 64, 64, 4
    $region9: #{tpu_custom_call.1} parent=1 // pred_fallthru
      _
    // Predicated region
    $region10: #{tpu_custom_call.1} parent=1 // pred_check
      _
    $region11: #{tpu_custom_call.1} parent=1 // pred_check_branch
      %36 = sbr.rel (0) target = $region13
    $region12: #{tpu_custom_call.1} parent=1 // pred_region
      %s38 = ssub.s32 16, 16
      %39 = vsyncadd [#allocation6], %s38
      %s41 = sshll.u32 [#allocation7], 4
      %s42 = int_to_ptr.vmem [resolvable:$true] %s41
      %44 = dma.hbm_to_vmem [thread:$0]  %s2, 16, %s42, [#allocation6]
    $region13: #{tpu_custom_call.1} parent=1 // pred_fallthru
      _
    // Predicated region
    $region14: #{tpu_custom_call.1} parent=1 // pred_check
      _
    $region15: #{tpu_custom_call.1} parent=1 // pred_check_branch
      %46 = sbr.rel (0) target = $region17
    $region16: #{tpu_custom_call.1} parent=1 // pred_region
      %47 = dma.done [#allocation3], 4096
    $region17: #{tpu_custom_call.1} parent=1 // pred_fallthru
      _
    // Predicated region
    $region18: #{tpu_custom_call.1} parent=1 // pred_check
      _
    $region19: #{tpu_custom_call.1} parent=1 // pred_check_branch
      %49 = sbr.rel (0) target = $region21
    $region20: #{tpu_custom_call.1} parent=1 // pred_region
      %50 = dma.done [#allocation6], 1024
    $region21: #{tpu_custom_call.1} parent=1 // pred_fallthru
      _
    // Predicated region
    $region22: #{tpu_custom_call.1} parent=1 // pred_check
      _
    $region23: #{tpu_custom_call.1} parent=1 // pred_check_branch
      %52 = sbr.rel (0) target = $region25
    $region24: #{tpu_custom_call.1} parent=1 // pred_region
      %53 = dma.done [#allocation6], 16
    $region25: #{tpu_custom_call.1} parent=1 // pred_fallthru
      _
    %v55 = vld [vmem:[#allocation2] sm:$0xf]
    %v56 = vld [vmem:[#allocation2 + $0x4] sm:$0xf]
    %v57 = vld [vmem:[#allocation2 + $0x8] sm:$0xf]
    %v58 = vld [vmem:[#allocation2 + $0xc] sm:$0xf]
    %v59 = vld [vmem:[#allocation2 + $0x10] sm:$0xf]
    %v60 = vld [vmem:[#allocation2 + $0x14] sm:$0xf]
    %v61 = vld [vmem:[#allocation2 + $0x18] sm:$0xf]
    %v62 = vld [vmem:[#allocation2 + $0x1c] sm:$0xf]
    %v63 = vld [vmem:[#allocation2 + $0x20] sm:$0xf]
    %v64 = vld [vmem:[#allocation2 + $0x24] sm:$0xf]
    %v65 = vld [vmem:[#allocation2 + $0x28] sm:$0xf]
    %v66 = vld [vmem:[#allocation2 + $0x2c] sm:$0xf]
    %v67 = vld [vmem:[#allocation2 + $0x30] sm:$0xf]
    %v68 = vld [vmem:[#allocation2 + $0x34] sm:$0xf]
    %v69 = vld [vmem:[#allocation2 + $0x38] sm:$0xf]
    %v70 = vld [vmem:[#allocation2 + $0x3c] sm:$0xf]
    %v71 = vld [vmem:[#allocation2 + $0x40] sm:$0xf]
    %v72 = vld [vmem:[#allocation2 + $0x44] sm:$0xf]
    %v73 = vld [vmem:[#allocation2 + $0x48] sm:$0xf]
    %v74 = vld [vmem:[#allocation2 + $0x4c] sm:$0xf]
    %v75 = vld [vmem:[#allocation2 + $0x50] sm:$0xf]
    %v76 = vld [vmem:[#allocation2 + $0x54] sm:$0xf]
    %v77 = vld [vmem:[#allocation2 + $0x58] sm:$0xf]
    %v78 = vld [vmem:[#allocation2 + $0x5c] sm:$0xf]
    %v79 = vld [vmem:[#allocation2 + $0x60] sm:$0xf]
    %v80 = vld [vmem:[#allocation2 + $0x64] sm:$0xf]
    %v81 = vld [vmem:[#allocation2 + $0x68] sm:$0xf]
    %v82 = vld [vmem:[#allocation2 + $0x6c] sm:$0xf]
    %v83 = vld [vmem:[#allocation2 + $0x70] sm:$0xf]
    %v84 = vld [vmem:[#allocation2 + $0x74] sm:$0xf]
    %v85 = vld [vmem:[#allocation2 + $0x78] sm:$0xf]
    %v86 = vld [vmem:[#allocation2 + $0x7c] sm:$0xf]
    %v87 = vld [vmem:[#allocation2 + $0x80] sm:$0xf]
    %v88 = vld [vmem:[#allocation2 + $0x84] sm:$0xf]
    %v89 = vld [vmem:[#allocation2 + $0x88] sm:$0xf]
    %v90 = vld [vmem:[#allocation2 + $0x8c] sm:$0xf]
    %v91 = vld [vmem:[#allocation2 + $0x90] sm:$0xf]
    %v92 = vld [vmem:[#allocation2 + $0x94] sm:$0xf]
    %v93 = vld [vmem:[#allocation2 + $0x98] sm:$0xf]
    %v94 = vld [vmem:[#allocation2 + $0x9c] sm:$0xf]
    %v95 = vld [vmem:[#allocation2 + $0xa0] sm:$0xf]
    %v96 = vld [vmem:[#allocation2 + $0xa4] sm:$0xf]
    %v97 = vld [vmem:[#allocation2 + $0xa8] sm:$0xf]
    %v98 = vld [vmem:[#allocation2 + $0xac] sm:$0xf]
    %v99 = vld [vmem:[#allocation2 + $0xb0] sm:$0xf]
    %v100 = vld [vmem:[#allocation2 + $0xb4] sm:$0xf]
    %v101 = vld [vmem:[#allocation2 + $0xb8] sm:$0xf]
    %v102 = vld [vmem:[#allocation2 + $0xbc] sm:$0xf]
    %v103 = vld [vmem:[#allocation2 + $0xc0] sm:$0xf]
    %v104 = vld [vmem:[#allocation2 + $0xc4] sm:$0xf]
    %v105 = vld [vmem:[#allocation2 + $0xc8] sm:$0xf]
    %v106 = vld [vmem:[#allocation2 + $0xcc] sm:$0xf]
    %v107 = vld [vmem:[#allocation2 + $0xd0] sm:$0xf]
    %v108 = vld [vmem:[#allocation2 + $0xd4] sm:$0xf]
    %v109 = vld [vmem:[#allocation2 + $0xd8] sm:$0xf]
    %v110 = vld [vmem:[#allocation2 + $0xdc] sm:$0xf]
    %v111 = vld [vmem:[#allocation2 + $0xe0] sm:$0xf]
    %v112 = vld [vmem:[#allocation2 + $0xe4] sm:$0xf]
    %v113 = vld [vmem:[#allocation2 + $0xe8] sm:$0xf]
    %v114 = vld [vmem:[#allocation2 + $0xec] sm:$0xf]
    %v115 = vld [vmem:[#allocation2 + $0xf0] sm:$0xf]
    %v116 = vld [vmem:[#allocation2 + $0xf4] sm:$0xf]
    %v117 = vld [vmem:[#allocation2 + $0xf8] sm:$0xf]
    %v118 = vld [vmem:[#allocation2 + $0xfc] sm:$0xf]
    %v119 = vld [vmem:[#allocation5] sm:$0xf]
    %v120 = vld [vmem:[#allocation5 + $0x4] sm:$0xf]
    %v121 = vld [vmem:[#allocation5 + $0x8] sm:$0xf]
    %v122 = vld [vmem:[#allocation5 + $0xc] sm:$0xf]
    %v123 = vld [vmem:[#allocation5 + $0x10] sm:$0xf]
    %v124 = vld [vmem:[#allocation5 + $0x14] sm:$0xf]
    %v125 = vld [vmem:[#allocation5 + $0x18] sm:$0xf]
    %v126 = vld [vmem:[#allocation5 + $0x1c] sm:$0xf]
    %v127 = vld [vmem:[#allocation5 + $0x20] sm:$0xf]
    %v128 = vld [vmem:[#allocation5 + $0x24] sm:$0xf]
    %v129 = vld [vmem:[#allocation5 + $0x28] sm:$0xf]
    %v130 = vld [vmem:[#allocation5 + $0x2c] sm:$0xf]
    %v131 = vld [vmem:[#allocation5 + $0x30] sm:$0xf]
    %v132 = vld [vmem:[#allocation5 + $0x34] sm:$0xf]
    %v133 = vld [vmem:[#allocation5 + $0x38] sm:$0xf]
    %v134 = vld [vmem:[#allocation5 + $0x3c] sm:$0xf]
    %v135 = vld [vmem:[#allocation7] sm:$0x1]
    %v137 = vlaneseq
    %v138 = vshrl.u32 %v137, 7
    %v139 = vsub.s32 0, %v138
    %v140 = vrot.slane %v135, %v139
    %v206 = vunpack.c.l.b16 %v55
    %v207 = vunpack.c.l.b16 %v56
    %v208 = vunpack.c.l.b16 %v57
    %v209 = vunpack.c.l.b16 %v58
    %v210 = vunpack.c.l.b16 %v59
    %v211 = vunpack.c.l.b16 %v60
    %v212 = vunpack.c.l.b16 %v61
    %v213 = vunpack.c.l.b16 %v62
    %v214 = vunpack.c.l.b16 %v63
    %v215 = vunpack.c.l.b16 %v64
    %v216 = vunpack.c.l.b16 %v65
    %v217 = vunpack.c.l.b16 %v66
    %v218 = vunpack.c.l.b16 %v67
    %v219 = vunpack.c.l.b16 %v68
    %v220 = vunpack.c.l.b16 %v69
    %v221 = vunpack.c.l.b16 %v70
    %v222 = vunpack.c.l.b16 %v71
    %v223 = vunpack.c.l.b16 %v72
    %v224 = vunpack.c.l.b16 %v73
    %v225 = vunpack.c.l.b16 %v74
    %v226 = vunpack.c.l.b16 %v75
    %v227 = vunpack.c.l.b16 %v76
    %v228 = vunpack.c.l.b16 %v77
    %v229 = vunpack.c.l.b16 %v78
    %v230 = vunpack.c.l.b16 %v79
    %v231 = vunpack.c.l.b16 %v80
    %v232 = vunpack.c.l.b16 %v81
    %v233 = vunpack.c.l.b16 %v82
    %v234 = vunpack.c.l.b16 %v83
    %v235 = vunpack.c.l.b16 %v84
    %v236 = vunpack.c.l.b16 %v85
    %v237 = vunpack.c.l.b16 %v86
    %v238 = vunpack.c.l.b16 %v87
    %v239 = vunpack.c.l.b16 %v88
    %v240 = vunpack.c.l.b16 %v89
    %v241 = vunpack.c.l.b16 %v90
    %v242 = vunpack.c.l.b16 %v91
    %v243 = vunpack.c.l.b16 %v92
    %v244 = vunpack.c.l.b16 %v93
    %v245 = vunpack.c.l.b16 %v94
    %v246 = vunpack.c.l.b16 %v95
    %v247 = vunpack.c.l.b16 %v96
    %v248 = vunpack.c.l.b16 %v97
    %v249 = vunpack.c.l.b16 %v98
    %v250 = vunpack.c.l.b16 %v99
    %v251 = vunpack.c.l.b16 %v100
    %v252 = vunpack.c.l.b16 %v101
    %v253 = vunpack.c.l.b16 %v102
    %v254 = vunpack.c.l.b16 %v103
    %v255 = vunpack.c.l.b16 %v104
    %v256 = vunpack.c.l.b16 %v105
    %v257 = vunpack.c.l.b16 %v106
    %v258 = vunpack.c.l.b16 %v107
    %v259 = vunpack.c.l.b16 %v108
    %v260 = vunpack.c.l.b16 %v109
    %v261 = vunpack.c.l.b16 %v110
    %v262 = vunpack.c.l.b16 %v111
    %v263 = vunpack.c.l.b16 %v112
    %v264 = vunpack.c.l.b16 %v113
    %v265 = vunpack.c.l.b16 %v114
    %v266 = vunpack.c.l.b16 %v115
    %v267 = vunpack.c.l.b16 %v116
    %v268 = vunpack.c.l.b16 %v117
    %v269 = vunpack.c.l.b16 %v118
    %v270 = vpack.c.b16 %v207, %v206
    %v271 = vpack.c.b16 %v209, %v208
    %v272 = vpack.c.b16 %v211, %v210
    %v273 = vpack.c.b16 %v213, %v212
    %v274 = vpack.c.b16 %v215, %v214
    %v275 = vpack.c.b16 %v217, %v216
    %v276 = vpack.c.b16 %v219, %v218
    %v277 = vpack.c.b16 %v221, %v220
    %v278 = vpack.c.b16 %v223, %v222
    %v279 = vpack.c.b16 %v225, %v224
    %v280 = vpack.c.b16 %v227, %v226
    %v281 = vpack.c.b16 %v229, %v228
    %v282 = vpack.c.b16 %v231, %v230
    %v283 = vpack.c.b16 %v233, %v232
    %v284 = vpack.c.b16 %v235, %v234
    %v285 = vpack.c.b16 %v237, %v236
    %v286 = vpack.c.b16 %v239, %v238
    %v287 = vpack.c.b16 %v241, %v240
    %v288 = vpack.c.b16 %v243, %v242
    %v289 = vpack.c.b16 %v245, %v244
    %v290 = vpack.c.b16 %v247, %v246
    %v291 = vpack.c.b16 %v249, %v248
    %v292 = vpack.c.b16 %v251, %v250
    %v293 = vpack.c.b16 %v253, %v252
    %v294 = vpack.c.b16 %v255, %v254
    %v295 = vpack.c.b16 %v257, %v256
    %v296 = vpack.c.b16 %v259, %v258
    %v297 = vpack.c.b16 %v261, %v260
    %v298 = vpack.c.b16 %v263, %v262
    %v299 = vpack.c.b16 %v265, %v264
    %v300 = vpack.c.b16 %v267, %v266
    %v301 = vpack.c.b16 %v269, %v268
    %v350 = vunpack.c.l.b16 %v119
    %v351 = vunpack.c.l.b16 %v120
    %v352 = vunpack.c.l.b16 %v121
    %v353 = vunpack.c.l.b16 %v122
    %v354 = vunpack.c.l.b16 %v123
    %v355 = vunpack.c.l.b16 %v124
    %v356 = vunpack.c.l.b16 %v125
    %v357 = vunpack.c.l.b16 %v126
    %v358 = vunpack.c.l.b16 %v127
    %v359 = vunpack.c.l.b16 %v128
    %v360 = vunpack.c.l.b16 %v129
    %v361 = vunpack.c.l.b16 %v130
    %v362 = vunpack.c.l.b16 %v131
    %v363 = vunpack.c.l.b16 %v132
    %v364 = vunpack.c.l.b16 %v133
    %v365 = vunpack.c.l.b16 %v134
    %v366 = vpack.c.b16 %v351, %v350
    %v367 = vpack.c.b16 %v353, %v352
    %v368 = vpack.c.b16 %v355, %v354
    %v369 = vpack.c.b16 %v357, %v356
    %v370 = vpack.c.b16 %v359, %v358
    %v371 = vpack.c.b16 %v361, %v360
    %v372 = vpack.c.b16 %v363, %v362
    %v373 = vpack.c.b16 %v365, %v364
    %382 = vmatprep.subr.bf16.mxu0 0
    %383 = vmatpush1.bf16.msra.mxu0 %v366
    %384 = vmatprep.subr.bf16.mxu0 0
    %385 = vmatpush1.bf16.msra.mxu0 %v367
    %386 = vmatprep.subr.bf16.mxu0 0
    %387 = vmatpush1.bf16.msra.mxu0 %v368
    %388 = vmatprep.subr.bf16.mxu0 0
    %389 = vmatpush1.bf16.msra.mxu0 %v369
    %390 = vmatprep.subr.bf16.mxu0 0
    %391 = vmatpush1.bf16.msra.mxu0 %v370
    %392 = vmatprep.subr.bf16.mxu0 0
    %393 = vmatpush1.bf16.msra.mxu0 %v371
    %394 = vmatprep.subr.bf16.mxu0 0
    %395 = vmatpush1.bf16.msra.mxu0 %v372
    %396 = vmatprep.subr.bf16.mxu0 0
    %397 = vmatpush1.bf16.msra.mxu0 %v373
    %398 = vmatprep.subr.bf16.mxu0 0
    %399 = vmatpush1.bf16.msra.mxu0 0
    %400 = vmatprep.subr.bf16.mxu0 0
    %401 = vmatpush1.bf16.msra.mxu0 0
    %402 = vmatprep.subr.bf16.mxu0 0
    %403 = vmatpush1.bf16.msra.mxu0 0
    %404 = vmatprep.subr.bf16.mxu0 0
    %405 = vmatpush1.bf16.msra.mxu0 0
    %406 = vmatprep.subr.bf16.mxu0 0
    %407 = vmatpush1.bf16.msra.mxu0 0
    %408 = vmatprep.subr.bf16.mxu0 0
    %409 = vmatpush1.bf16.msra.mxu0 0
    %410 = vmatprep.subr.bf16.mxu0 0
    %411 = vmatpush1.bf16.msra.mxu0 0
    %412 = vmatprep.subr.bf16.mxu0 0
    %413 = vmatpush1.bf16.msra.mxu0 0
    %414 = vmatprep.mubr.bf16.mxu0 0
    %415 = vmatmul.mubr.bf16.gmra.mrb[0].mxu0 %v270
    %v416 = vpop.f32.mrb[0].mxu0
    %v417 = vadd.f32 %v140, %v416
    %v418 = vpop.f32.mrb[0].mxu0
    %v419 = vpop.f32.mrb[0].mxu0
    %v420 = vadd.f32 %v140, %v419
    %v421 = vpop.f32.mrb[0].mxu0
    %422 = vmatprep.mubr.bf16.mxu0 0
    %423 = vmatmul.mubr.bf16.gmra.mrb[0].mxu0 %v271
    %v424 = vpop.f32.mrb[0].mxu0
    %v425 = vadd.f32 %v140, %v424
    %v426 = vpop.f32.mrb[0].mxu0
    %v427 = vpop.f32.mrb[0].mxu0
    %v428 = vadd.f32 %v140, %v427
    %v429 = vpop.f32.mrb[0].mxu0
    %430 = vmatprep.mubr.bf16.mxu0 0
    %431 = vmatmul.mubr.bf16.gmra.mrb[0].mxu0 %v272
    %v432 = vpop.f32.mrb[0].mxu0
    %v433 = vadd.f32 %v140, %v432
    %v434 = vpop.f32.mrb[0].mxu0
    %v435 = vpop.f32.mrb[0].mxu0
    %v436 = vadd.f32 %v140, %v435
    %v437 = vpop.f32.mrb[0].mxu0
    %438 = vmatprep.mubr.bf16.mxu0 0
    %439 = vmatmul.mubr.bf16.gmra.mrb[0].mxu0 %v273
    %v440 = vpop.f32.mrb[0].mxu0
    %v441 = vadd.f32 %v140, %v440
    %v442 = vpop.f32.mrb[0].mxu0
    %v443 = vpop.f32.mrb[0].mxu0
    %v444 = vadd.f32 %v140, %v443
    %v445 = vpop.f32.mrb[0].mxu0
    %446 = vmatprep.mubr.bf16.mxu0 0
    %447 = vmatmul.mubr.bf16.gmra.mrb[0].mxu0 %v274
    %v448 = vpop.f32.mrb[0].mxu0
    %v449 = vadd.f32 %v140, %v448
    %v450 = vpop.f32.mrb[0].mxu0
    %v451 = vpop.f32.mrb[0].mxu0
    %v452 = vadd.f32 %v140, %v451
    %v453 = vpop.f32.mrb[0].mxu0
    %454 = vmatprep.mubr.bf16.mxu0 0
    %455 = vmatmul.mubr.bf16.gmra.mrb[0].mxu0 %v275
    %v456 = vpop.f32.mrb[0].mxu0
    %v457 = vadd.f32 %v140, %v456
    %v458 = vpop.f32.mrb[0].mxu0
    %v459 = vpop.f32.mrb[0].mxu0
    %v460 = vadd.f32 %v140, %v459
    %v461 = vpop.f32.mrb[0].mxu0
    %462 = vmatprep.mubr.bf16.mxu0 0
    %463 = vmatmul.mubr.bf16.gmra.mrb[0].mxu0 %v276
    %v464 = vpop.f32.mrb[0].mxu0
    %v465 = vadd.f32 %v140, %v464
    %v466 = vpop.f32.mrb[0].mxu0
    %v467 = vpop.f32.mrb[0].mxu0
    %v468 = vadd.f32 %v140, %v467
    %v469 = vpop.f32.mrb[0].mxu0
    %470 = vmatprep.mubr.bf16.mxu0 0
    %471 = vmatmul.mubr.bf16.gmra.mrb[0].mxu0 %v277
    %v472 = vpop.f32.mrb[0].mxu0
    %v473 = vadd.f32 %v140, %v472
    %v474 = vpop.f32.mrb[0].mxu0
    %v475 = vpop.f32.mrb[0].mxu0
    %v476 = vadd.f32 %v140, %v475
    %v477 = vpop.f32.mrb[0].mxu0
    %478 = vmatprep.mubr.bf16.mxu0 0
    %479 = vmatmul.mubr.bf16.gmra.mrb[0].mxu0 %v278
    %v480 = vpop.f32.mrb[0].mxu0
    %v481 = vadd.f32 %v140, %v480
    %v482 = vpop.f32.mrb[0].mxu0
    %v483 = vpop.f32.mrb[0].mxu0
    %v484 = vadd.f32 %v140, %v483
    %v485 = vpop.f32.mrb[0].mxu0
    %486 = vmatprep.mubr.bf16.mxu0 0
    %487 = vmatmul.mubr.bf16.gmra.mrb[0].mxu0 %v279
    %v488 = vpop.f32.mrb[0].mxu0
    %v489 = vadd.f32 %v140, %v488
    %v490 = vpop.f32.mrb[0].mxu0
    %v491 = vpop.f32.mrb[0].mxu0
    %v492 = vadd.f32 %v140, %v491
    %v493 = vpop.f32.mrb[0].mxu0
    %494 = vmatprep.mubr.bf16.mxu0 0
    %495 = vmatmul.mubr.bf16.gmra.mrb[0].mxu0 %v280
    %v496 = vpop.f32.mrb[0].mxu0
    %v497 = vadd.f32 %v140, %v496
    %v498 = vpop.f32.mrb[0].mxu0
    %v499 = vpop.f32.mrb[0].mxu0
    %v500 = vadd.f32 %v140, %v499
    %v501 = vpop.f32.mrb[0].mxu0
    %502 = vmatprep.mubr.bf16.mxu0 0
    %503 = vmatmul.mubr.bf16.gmra.mrb[0].mxu0 %v281
    %v504 = vpop.f32.mrb[0].mxu0
    %v505 = vadd.f32 %v140, %v504
    %v506 = vpop.f32.mrb[0].mxu0
    %v507 = vpop.f32.mrb[0].mxu0
    %v508 = vadd.f32 %v140, %v507
    %v509 = vpop.f32.mrb[0].mxu0
    %510 = vmatprep.mubr.bf16.mxu0 0
    %511 = vmatmul.mubr.bf16.gmra.mrb[0].mxu0 %v282
    %v512 = vpop.f32.mrb[0].mxu0
    %v513 = vadd.f32 %v140, %v512
    %v514 = vpop.f32.mrb[0].mxu0
    %v515 = vpop.f32.mrb[0].mxu0
    %v516 = vadd.f32 %v140, %v515
    %v517 = vpop.f32.mrb[0].mxu0
    %518 = vmatprep.mubr.bf16.mxu0 0
    %519 = vmatmul.mubr.bf16.gmra.mrb[0].mxu0 %v283
    %v520 = vpop.f32.mrb[0].mxu0
    %v521 = vadd.f32 %v140, %v520
    %v522 = vpop.f32.mrb[0].mxu0
    %v523 = vpop.f32.mrb[0].mxu0
    %v524 = vadd.f32 %v140, %v523
    %v525 = vpop.f32.mrb[0].mxu0
    %526 = vmatprep.mubr.bf16.mxu0 0
    %527 = vmatmul.mubr.bf16.gmra.mrb[0].mxu0 %v284
    %v528 = vpop.f32.mrb[0].mxu0
    %v529 = vadd.f32 %v140, %v528
    %v530 = vpop.f32.mrb[0].mxu0
    %v531 = vpop.f32.mrb[0].mxu0
    %v532 = vadd.f32 %v140, %v531
    %v533 = vpop.f32.mrb[0].mxu0
    %534 = vmatprep.mubr.bf16.mxu0 0
    %535 = vmatmul.mubr.bf16.gmra.mrb[0].mxu0 %v285
    %v536 = vpop.f32.mrb[0].mxu0
    %v537 = vadd.f32 %v140, %v536
    %v538 = vpop.f32.mrb[0].mxu0
    %v539 = vpop.f32.mrb[0].mxu0
    %v540 = vadd.f32 %v140, %v539
    %v541 = vpop.f32.mrb[0].mxu0
    %542 = vmatprep.mubr.bf16.mxu0 0
    %543 = vmatmul.mubr.bf16.gmra.mrb[0].mxu0 %v286
    %v544 = vpop.f32.mrb[0].mxu0
    %v545 = vadd.f32 %v140, %v544
    %v546 = vpop.f32.mrb[0].mxu0
    %v547 = vpop.f32.mrb[0].mxu0
    %v548 = vadd.f32 %v140, %v547
    %v549 = vpop.f32.mrb[0].mxu0
    %550 = vmatprep.mubr.bf16.mxu0 0
    %551 = vmatmul.mubr.bf16.gmra.mrb[0].mxu0 %v287
    %v552 = vpop.f32.mrb[0].mxu0
    %v553 = vadd.f32 %v140, %v552
    %v554 = vpop.f32.mrb[0].mxu0
    %v555 = vpop.f32.mrb[0].mxu0
    %v556 = vadd.f32 %v140, %v555
    %v557 = vpop.f32.mrb[0].mxu0
    %558 = vmatprep.mubr.bf16.mxu0 0
    %559 = vmatmul.mubr.bf16.gmra.mrb[0].mxu0 %v288
    %v560 = vpop.f32.mrb[0].mxu0
    %v561 = vadd.f32 %v140, %v560
    %v562 = vpop.f32.mrb[0].mxu0
    %v563 = vpop.f32.mrb[0].mxu0
    %v564 = vadd.f32 %v140, %v563
    %v565 = vpop.f32.mrb[0].mxu0
    %566 = vmatprep.mubr.bf16.mxu0 0
    %567 = vmatmul.mubr.bf16.gmra.mrb[0].mxu0 %v289
    %v568 = vpop.f32.mrb[0].mxu0
    %v569 = vadd.f32 %v140, %v568
    %v570 = vpop.f32.mrb[0].mxu0
    %v571 = vpop.f32.mrb[0].mxu0
    %v572 = vadd.f32 %v140, %v571
    %v573 = vpop.f32.mrb[0].mxu0
    %574 = vmatprep.mubr.bf16.mxu0 0
    %575 = vmatmul.mubr.bf16.gmra.mrb[0].mxu0 %v290
    %v576 = vpop.f32.mrb[0].mxu0
    %v577 = vadd.f32 %v140, %v576
    %v578 = vpop.f32.mrb[0].mxu0
    %v579 = vpop.f32.mrb[0].mxu0
    %v580 = vadd.f32 %v140, %v579
    %v581 = vpop.f32.mrb[0].mxu0
    %582 = vmatprep.mubr.bf16.mxu0 0
    %583 = vmatmul.mubr.bf16.gmra.mrb[0].mxu0 %v291
    %v584 = vpop.f32.mrb[0].mxu0
    %v585 = vadd.f32 %v140, %v584
    %v586 = vpop.f32.mrb[0].mxu0
    %v587 = vpop.f32.mrb[0].mxu0
    %v588 = vadd.f32 %v140, %v587
    %v589 = vpop.f32.mrb[0].mxu0
    %590 = vmatprep.mubr.bf16.mxu0 0
    %591 = vmatmul.mubr.bf16.gmra.mrb[0].mxu0 %v292
    %v592 = vpop.f32.mrb[0].mxu0
    %v593 = vadd.f32 %v140, %v592
    %v594 = vpop.f32.mrb[0].mxu0
    %v595 = vpop.f32.mrb[0].mxu0
    %v596 = vadd.f32 %v140, %v595
    %v597 = vpop.f32.mrb[0].mxu0
    %598 = vmatprep.mubr.bf16.mxu0 0
    %599 = vmatmul.mubr.bf16.gmra.mrb[0].mxu0 %v293
    %v600 = vpop.f32.mrb[0].mxu0
    %v601 = vadd.f32 %v140, %v600
    %v602 = vpop.f32.mrb[0].mxu0
    %v603 = vpop.f32.mrb[0].mxu0
    %v604 = vadd.f32 %v140, %v603
    %v605 = vpop.f32.mrb[0].mxu0
    %606 = vmatprep.mubr.bf16.mxu0 0
    %607 = vmatmul.mubr.bf16.gmra.mrb[0].mxu0 %v294
    %v608 = vpop.f32.mrb[0].mxu0
    %v609 = vadd.f32 %v140, %v608
    %v610 = vpop.f32.mrb[0].mxu0
    %v611 = vpop.f32.mrb[0].mxu0
    %v612 = vadd.f32 %v140, %v611
    %v613 = vpop.f32.mrb[0].mxu0
    %614 = vmatprep.mubr.bf16.mxu0 0
    %615 = vmatmul.mubr.bf16.gmra.mrb[0].mxu0 %v295
    %v616 = vpop.f32.mrb[0].mxu0
    %v617 = vadd.f32 %v140, %v616
    %v618 = vpop.f32.mrb[0].mxu0
    %v619 = vpop.f32.mrb[0].mxu0
    %v620 = vadd.f32 %v140, %v619
    %v621 = vpop.f32.mrb[0].mxu0
    %622 = vmatprep.mubr.bf16.mxu0 0
    %623 = vmatmul.mubr.bf16.gmra.mrb[0].mxu0 %v296
    %v624 = vpop.f32.mrb[0].mxu0
    %v625 = vadd.f32 %v140, %v624
    %v626 = vpop.f32.mrb[0].mxu0
    %v627 = vpop.f32.mrb[0].mxu0
    %v628 = vadd.f32 %v140, %v627
    %v629 = vpop.f32.mrb[0].mxu0
    %630 = vmatprep.mubr.bf16.mxu0 0
    %631 = vmatmul.mubr.bf16.gmra.mrb[0].mxu0 %v297
    %v632 = vpop.f32.mrb[0].mxu0
    %v633 = vadd.f32 %v140, %v632
    %v634 = vpop.f32.mrb[0].mxu0
    %v635 = vpop.f32.mrb[0].mxu0
    %v636 = vadd.f32 %v140, %v635
    %v637 = vpop.f32.mrb[0].mxu0
    %638 = vmatprep.mubr.bf16.mxu0 0
    %639 = vmatmul.mubr.bf16.gmra.mrb[0].mxu0 %v298
    %v640 = vpop.f32.mrb[0].mxu0
    %v641 = vadd.f32 %v140, %v640
    %v642 = vpop.f32.mrb[0].mxu0
    %v643 = vpop.f32.mrb[0].mxu0
    %v644 = vadd.f32 %v140, %v643
    %v645 = vpop.f32.mrb[0].mxu0
    %646 = vmatprep.mubr.bf16.mxu0 0
    %647 = vmatmul.mubr.bf16.gmra.mrb[0].mxu0 %v299
    %v648 = vpop.f32.mrb[0].mxu0
    %v649 = vadd.f32 %v140, %v648
    %v650 = vpop.f32.mrb[0].mxu0
    %v651 = vpop.f32.mrb[0].mxu0
    %v652 = vadd.f32 %v140, %v651
    %v653 = vpop.f32.mrb[0].mxu0
    %654 = vmatprep.mubr.bf16.mxu0 0
    %655 = vmatmul.mubr.bf16.gmra.mrb[0].mxu0 %v300
    %v656 = vpop.f32.mrb[0].mxu0
    %v657 = vadd.f32 %v140, %v656
    %v658 = vpop.f32.mrb[0].mxu0
    %v659 = vpop.f32.mrb[0].mxu0
    %v660 = vadd.f32 %v140, %v659
    %v661 = vpop.f32.mrb[0].mxu0
    %662 = vmatprep.mubr.bf16.mxu0 0
    %663 = vmatmul.mubr.bf16.gmra.mrb[0].mxu0 %v301
    %v664 = vpop.f32.mrb[0].mxu0
    %v665 = vadd.f32 %v140, %v664
    %v666 = vpop.f32.mrb[0].mxu0
    %v667 = vpop.f32.mrb[0].mxu0
    %v668 = vadd.f32 %v140, %v667
    %v669 = vpop.f32.mrb[0].mxu0
    %670 = vdwg.mxu0
    %v671 = vmax.f32 %v417, 0.0
    %v672 = vmax.f32 %v420, 0.0
    %v673 = vmax.f32 %v425, 0.0
    %v674 = vmax.f32 %v428, 0.0
    %v675 = vmax.f32 %v433, 0.0
    %v676 = vmax.f32 %v436, 0.0
    %v677 = vmax.f32 %v441, 0.0
    %v678 = vmax.f32 %v444, 0.0
    %v679 = vmax.f32 %v449, 0.0
    %v680 = vmax.f32 %v452, 0.0
    %v681 = vmax.f32 %v457, 0.0
    %v682 = vmax.f32 %v460, 0.0
    %v683 = vmax.f32 %v465, 0.0
    %v684 = vmax.f32 %v468, 0.0
    %v685 = vmax.f32 %v473, 0.0
    %v686 = vmax.f32 %v476, 0.0
    %v687 = vmax.f32 %v481, 0.0
    %v688 = vmax.f32 %v484, 0.0
    %v689 = vmax.f32 %v489, 0.0
    %v690 = vmax.f32 %v492, 0.0
    %v691 = vmax.f32 %v497, 0.0
    %v692 = vmax.f32 %v500, 0.0
    %v693 = vmax.f32 %v505, 0.0
    %v694 = vmax.f32 %v508, 0.0
    %v695 = vmax.f32 %v513, 0.0
    %v696 = vmax.f32 %v516, 0.0
    %v697 = vmax.f32 %v521, 0.0
    %v698 = vmax.f32 %v524, 0.0
    %v699 = vmax.f32 %v529, 0.0
    %v700 = vmax.f32 %v532, 0.0
    %v701 = vmax.f32 %v537, 0.0
    %v702 = vmax.f32 %v540, 0.0
    %v703 = vmax.f32 %v545, 0.0
    %v704 = vmax.f32 %v548, 0.0
    %v705 = vmax.f32 %v553, 0.0
    %v706 = vmax.f32 %v556, 0.0
    %v707 = vmax.f32 %v561, 0.0
    %v708 = vmax.f32 %v564, 0.0
    %v709 = vmax.f32 %v569, 0.0
    %v710 = vmax.f32 %v572, 0.0
    %v711 = vmax.f32 %v577, 0.0
    %v712 = vmax.f32 %v580, 0.0
    %v713 = vmax.f32 %v585, 0.0
    %v714 = vmax.f32 %v588, 0.0
    %v715 = vmax.f32 %v593, 0.0
    %v716 = vmax.f32 %v596, 0.0
    %v717 = vmax.f32 %v601, 0.0
    %v718 = vmax.f32 %v604, 0.0
    %v719 = vmax.f32 %v609, 0.0
    %v720 = vmax.f32 %v612, 0.0
    %v721 = vmax.f32 %v617, 0.0
    %v722 = vmax.f32 %v620, 0.0
    %v723 = vmax.f32 %v625, 0.0
    %v724 = vmax.f32 %v628, 0.0
    %v725 = vmax.f32 %v633, 0.0
    %v726 = vmax.f32 %v636, 0.0
    %v727 = vmax.f32 %v641, 0.0
    %v728 = vmax.f32 %v644, 0.0
    %v729 = vmax.f32 %v649, 0.0
    %v730 = vmax.f32 %v652, 0.0
    %v731 = vmax.f32 %v657, 0.0
    %v732 = vmax.f32 %v660, 0.0
    %v733 = vmax.f32 %v665, 0.0
    %v734 = vmax.f32 %v668, 0.0
    %v735 = vpack.c.bf16 %v672, %v671
    %v736 = vpack.c.bf16 %v674, %v673
    %v737 = vpack.c.bf16 %v676, %v675
    %v738 = vpack.c.bf16 %v678, %v677
    %v739 = vpack.c.bf16 %v680, %v679
    %v740 = vpack.c.bf16 %v682, %v681
    %v741 = vpack.c.bf16 %v684, %v683
    %v742 = vpack.c.bf16 %v686, %v685
    %v743 = vpack.c.bf16 %v688, %v687
    %v744 = vpack.c.bf16 %v690, %v689
    %v745 = vpack.c.bf16 %v692, %v691
    %v746 = vpack.c.bf16 %v694, %v693
    %v747 = vpack.c.bf16 %v696, %v695
    %v748 = vpack.c.bf16 %v698, %v697
    %v749 = vpack.c.bf16 %v700, %v699
    %v750 = vpack.c.bf16 %v702, %v701
    %v751 = vpack.c.bf16 %v704, %v703
    %v752 = vpack.c.bf16 %v706, %v705
    %v753 = vpack.c.bf16 %v708, %v707
    %v754 = vpack.c.bf16 %v710, %v709
    %v755 = vpack.c.bf16 %v712, %v711
    %v756 = vpack.c.bf16 %v714, %v713
    %v757 = vpack.c.bf16 %v716, %v715
    %v758 = vpack.c.bf16 %v718, %v717
    %v759 = vpack.c.bf16 %v720, %v719
    %v760 = vpack.c.bf16 %v722, %v721
    %v761 = vpack.c.bf16 %v724, %v723
    %v762 = vpack.c.bf16 %v726, %v725
    %v763 = vpack.c.bf16 %v728, %v727
    %v764 = vpack.c.bf16 %v730, %v729
    %v765 = vpack.c.bf16 %v732, %v731
    %v766 = vpack.c.bf16 %v734, %v733
    %v799 = vunpack.c.l.b16 %v735
    %v800 = vunpack.c.h.b16 %v735
    %v801 = vunpack.c.l.b16 %v736
    %v802 = vunpack.c.h.b16 %v736
    %v803 = vunpack.c.l.b16 %v737
    %v804 = vunpack.c.h.b16 %v737
    %v805 = vunpack.c.l.b16 %v738
    %v806 = vunpack.c.h.b16 %v738
    %v807 = vunpack.c.l.b16 %v739
    %v808 = vunpack.c.h.b16 %v739
    %v809 = vunpack.c.l.b16 %v740
    %v810 = vunpack.c.h.b16 %v740
    %v811 = vunpack.c.l.b16 %v741
    %v812 = vunpack.c.h.b16 %v741
    %v813 = vunpack.c.l.b16 %v742
    %v814 = vunpack.c.h.b16 %v742
    %v815 = vunpack.c.l.b16 %v743
    %v816 = vunpack.c.h.b16 %v743
    %v817 = vunpack.c.l.b16 %v744
    %v818 = vunpack.c.h.b16 %v744
    %v819 = vunpack.c.l.b16 %v745
    %v820 = vunpack.c.h.b16 %v745
    %v821 = vunpack.c.l.b16 %v746
    %v822 = vunpack.c.h.b16 %v746
    %v823 = vunpack.c.l.b16 %v747
    %v824 = vunpack.c.h.b16 %v747
    %v825 = vunpack.c.l.b16 %v748
    %v826 = vunpack.c.h.b16 %v748
    %v827 = vunpack.c.l.b16 %v749
    %v828 = vunpack.c.h.b16 %v749
    %v829 = vunpack.c.l.b16 %v750
    %v830 = vunpack.c.h.b16 %v750
    %v831 = vunpack.c.l.b16 %v751
    %v832 = vunpack.c.h.b16 %v751
    %v833 = vunpack.c.l.b16 %v752
    %v834 = vunpack.c.h.b16 %v752
    %v835 = vunpack.c.l.b16 %v753
    %v836 = vunpack.c.h.b16 %v753
    %v837 = vunpack.c.l.b16 %v754
    %v838 = vunpack.c.h.b16 %v754
    %v839 = vunpack.c.l.b16 %v755
    %v840 = vunpack.c.h.b16 %v755
    %v841 = vunpack.c.l.b16 %v756
    %v842 = vunpack.c.h.b16 %v756
    %v843 = vunpack.c.l.b16 %v757
    %v844 = vunpack.c.h.b16 %v757
    %v845 = vunpack.c.l.b16 %v758
    %v846 = vunpack.c.h.b16 %v758
    %v847 = vunpack.c.l.b16 %v759
    %v848 = vunpack.c.h.b16 %v759
    %v849 = vunpack.c.l.b16 %v760
    %v850 = vunpack.c.h.b16 %v760
    %v851 = vunpack.c.l.b16 %v761
    %v852 = vunpack.c.h.b16 %v761
    %v853 = vunpack.c.l.b16 %v762
    %v854 = vunpack.c.h.b16 %v762
    %v855 = vunpack.c.l.b16 %v763
    %v856 = vunpack.c.h.b16 %v763
    %v857 = vunpack.c.l.b16 %v764
    %v858 = vunpack.c.h.b16 %v764
    %v859 = vunpack.c.l.b16 %v765
    %v860 = vunpack.c.h.b16 %v765
    %v861 = vunpack.c.l.b16 %v766
    %v862 = vunpack.c.h.b16 %v766
    %v863 = vpack.c.b16 %v799, %v799
    %v864 = vpack.c.b16 %v800, %v800
    %v865 = vpack.c.b16 %v801, %v801
    %v866 = vpack.c.b16 %v802, %v802
    %v867 = vpack.c.b16 %v803, %v803
    %v868 = vpack.c.b16 %v804, %v804
    %v869 = vpack.c.b16 %v805, %v805
    %v870 = vpack.c.b16 %v806, %v806
    %v871 = vpack.c.b16 %v807, %v807
    %v872 = vpack.c.b16 %v808, %v808
    %v873 = vpack.c.b16 %v809, %v809
    %v874 = vpack.c.b16 %v810, %v810
    %v875 = vpack.c.b16 %v811, %v811
    %v876 = vpack.c.b16 %v812, %v812
    %v877 = vpack.c.b16 %v813, %v813
    %v878 = vpack.c.b16 %v814, %v814
    %v879 = vpack.c.b16 %v815, %v815
    %v880 = vpack.c.b16 %v816, %v816
    %v881 = vpack.c.b16 %v817, %v817
    %v882 = vpack.c.b16 %v818, %v818
    %v883 = vpack.c.b16 %v819, %v819
    %v884 = vpack.c.b16 %v820, %v820
    %v885 = vpack.c.b16 %v821, %v821
    %v886 = vpack.c.b16 %v822, %v822
    %v887 = vpack.c.b16 %v823, %v823
    %v888 = vpack.c.b16 %v824, %v824
    %v889 = vpack.c.b16 %v825, %v825
    %v890 = vpack.c.b16 %v826, %v826
    %v891 = vpack.c.b16 %v827, %v827
    %v892 = vpack.c.b16 %v828, %v828
    %v893 = vpack.c.b16 %v829, %v829
    %v894 = vpack.c.b16 %v830, %v830
    %v895 = vpack.c.b16 %v831, %v831
    %v896 = vpack.c.b16 %v832, %v832
    %v897 = vpack.c.b16 %v833, %v833
    %v898 = vpack.c.b16 %v834, %v834
    %v899 = vpack.c.b16 %v835, %v835
    %v900 = vpack.c.b16 %v836, %v836
    %v901 = vpack.c.b16 %v837, %v837
    %v902 = vpack.c.b16 %v838, %v838
    %v903 = vpack.c.b16 %v839, %v839
    %v904 = vpack.c.b16 %v840, %v840
    %v905 = vpack.c.b16 %v841, %v841
    %v906 = vpack.c.b16 %v842, %v842
    %v907 = vpack.c.b16 %v843, %v843
    %v908 = vpack.c.b16 %v844, %v844
    %v909 = vpack.c.b16 %v845, %v845
    %v910 = vpack.c.b16 %v846, %v846
    %v911 = vpack.c.b16 %v847, %v847
    %v912 = vpack.c.b16 %v848, %v848
    %v913 = vpack.c.b16 %v849, %v849
    %v914 = vpack.c.b16 %v850, %v850
    %v915 = vpack.c.b16 %v851, %v851
    %v916 = vpack.c.b16 %v852, %v852
    %v917 = vpack.c.b16 %v853, %v853
    %v918 = vpack.c.b16 %v854, %v854
    %v919 = vpack.c.b16 %v855, %v855
    %v920 = vpack.c.b16 %v856, %v856
    %v921 = vpack.c.b16 %v857, %v857
    %v922 = vpack.c.b16 %v858, %v858
    %v923 = vpack.c.b16 %v859, %v859
    %v924 = vpack.c.b16 %v860, %v860
    %v925 = vpack.c.b16 %v861, %v861
    %v926 = vpack.c.b16 %v862, %v862
    %991 = vst [vmem:[#allocation8] sm:$0xf] %v863
    %992 = vst [vmem:[#allocation8 + $0x4] sm:$0xf] %v864
    %993 = vst [vmem:[#allocation8 + $0x8] sm:$0xf] %v865
    %994 = vst [vmem:[#allocation8 + $0xc] sm:$0xf] %v866
    %995 = vst [vmem:[#allocation8 + $0x10] sm:$0xf] %v867
    %996 = vst [vmem:[#allocation8 + $0x14] sm:$0xf] %v868
    %997 = vst [vmem:[#allocation8 + $0x18] sm:$0xf] %v869
    %998 = vst [vmem:[#allocation8 + $0x1c] sm:$0xf] %v870
    %999 = vst [vmem:[#allocation8 + $0x20] sm:$0xf] %v871
    %1000 = vst [vmem:[#allocation8 + $0x24] sm:$0xf] %v872
    %1001 = vst [vmem:[#allocation8 + $0x28] sm:$0xf] %v873
    %1002 = vst [vmem:[#allocation8 + $0x2c] sm:$0xf] %v874
    %1003 = vst [vmem:[#allocation8 + $0x30] sm:$0xf] %v875
    %1004 = vst [vmem:[#allocation8 + $0x34] sm:$0xf] %v876
    %1005 = vst [vmem:[#allocation8 + $0x38] sm:$0xf] %v877
    %1006 = vst [vmem:[#allocation8 + $0x3c] sm:$0xf] %v878
    %1007 = vst [vmem:[#allocation8 + $0x40] sm:$0xf] %v879
    %1008 = vst [vmem:[#allocation8 + $0x44] sm:$0xf] %v880
    %1009 = vst [vmem:[#allocation8 + $0x48] sm:$0xf] %v881
    %1010 = vst [vmem:[#allocation8 + $0x4c] sm:$0xf] %v882
    %1011 = vst [vmem:[#allocation8 + $0x50] sm:$0xf] %v883
    %1012 = vst [vmem:[#allocation8 + $0x54] sm:$0xf] %v884
    %1013 = vst [vmem:[#allocation8 + $0x58] sm:$0xf] %v885
    %1014 = vst [vmem:[#allocation8 + $0x5c] sm:$0xf] %v886
    %1015 = vst [vmem:[#allocation8 + $0x60] sm:$0xf] %v887
    %1016 = vst [vmem:[#allocation8 + $0x64] sm:$0xf] %v888
    %1017 = vst [vmem:[#allocation8 + $0x68] sm:$0xf] %v889
    %1018 = vst [vmem:[#allocation8 + $0x6c] sm:$0xf] %v890
    %1019 = vst [vmem:[#allocation8 + $0x70] sm:$0xf] %v891
    %1020 = vst [vmem:[#allocation8 + $0x74] sm:$0xf] %v892
    %1021 = vst [vmem:[#allocation8 + $0x78] sm:$0xf] %v893
    %1022 = vst [vmem:[#allocation8 + $0x7c] sm:$0xf] %v894
    %1023 = vst [vmem:[#allocation8 + $0x80] sm:$0xf] %v895
    %1024 = vst [vmem:[#allocation8 + $0x84] sm:$0xf] %v896
    %1025 = vst [vmem:[#allocation8 + $0x88] sm:$0xf] %v897
    %1026 = vst [vmem:[#allocation8 + $0x8c] sm:$0xf] %v898
    %1027 = vst [vmem:[#allocation8 + $0x90] sm:$0xf] %v899
    %1028 = vst [vmem:[#allocation8 + $0x94] sm:$0xf] %v900
    %1029 = vst [vmem:[#allocation8 + $0x98] sm:$0xf] %v901
    %1030 = vst [vmem:[#allocation8 + $0x9c] sm:$0xf] %v902
    %1031 = vst [vmem:[#allocation8 + $0xa0] sm:$0xf] %v903
    %1032 = vst [vmem:[#allocation8 + $0xa4] sm:$0xf] %v904
    %1033 = vst [vmem:[#allocation8 + $0xa8] sm:$0xf] %v905
    %1034 = vst [vmem:[#allocation8 + $0xac] sm:$0xf] %v906
    %1035 = vst [vmem:[#allocation8 + $0xb0] sm:$0xf] %v907
    %1036 = vst [vmem:[#allocation8 + $0xb4] sm:$0xf] %v908
    %1037 = vst [vmem:[#allocation8 + $0xb8] sm:$0xf] %v909
    %1038 = vst [vmem:[#allocation8 + $0xbc] sm:$0xf] %v910
    %1039 = vst [vmem:[#allocation8 + $0xc0] sm:$0xf] %v911
    %1040 = vst [vmem:[#allocation8 + $0xc4] sm:$0xf] %v912
    %1041 = vst [vmem:[#allocation8 + $0xc8] sm:$0xf] %v913
    %1042 = vst [vmem:[#allocation8 + $0xcc] sm:$0xf] %v914
    %1043 = vst [vmem:[#allocation8 + $0xd0] sm:$0xf] %v915
    %1044 = vst [vmem:[#allocation8 + $0xd4] sm:$0xf] %v916
    %1045 = vst [vmem:[#allocation8 + $0xd8] sm:$0xf] %v917
    %1046 = vst [vmem:[#allocation8 + $0xdc] sm:$0xf] %v918
    %1047 = vst [vmem:[#allocation8 + $0xe0] sm:$0xf] %v919
    %1048 = vst [vmem:[#allocation8 + $0xe4] sm:$0xf] %v920
    %1049 = vst [vmem:[#allocation8 + $0xe8] sm:$0xf] %v921
    %1050 = vst [vmem:[#allocation8 + $0xec] sm:$0xf] %v922
    %1051 = vst [vmem:[#allocation8 + $0xf0] sm:$0xf] %v923
    %1052 = vst [vmem:[#allocation8 + $0xf4] sm:$0xf] %v924
    %1053 = vst [vmem:[#allocation8 + $0xf8] sm:$0xf] %v925
    %1054 = vst [vmem:[#allocation8 + $0xfc] sm:$0xf] %v926
    // Predicated region
    $region26: #{tpu_custom_call.1} parent=1 // pred_check
      _
    $region27: #{tpu_custom_call.1} parent=1 // pred_check_branch
      %1056 = sbr.rel (0) target = $region29
    $region28: #{tpu_custom_call.1} parent=1 // pred_region
      %s1058 = ssub.s32 4096, 4096
      %1059 = vsyncadd [#allocation4], %s1058
      %s1060 = sshll.u32 [#allocation8], 4
      %s1061 = int_to_ptr.vmem [resolvable:$true] %s1060
      %1066 = dma.vmem_to_hbm [thread:$0]  %s1061, 4096, %s3, [#allocation4], 64, 64, 4
    $region29: #{tpu_custom_call.1} parent=1 // pred_fallthru
      _
    // Predicated region
    $region30: #{tpu_custom_call.1} parent=1 // pred_check
      _
    $region31: #{tpu_custom_call.1} parent=1 // pred_check_branch
      %1068 = sbr.rel (0) target = $region33
    $region32: #{tpu_custom_call.1} parent=1 // pred_region
      %1069 = dma.done [#allocation4], 4096
    $region33: #{tpu_custom_call.1} parent=1 // pred_fallthru
      _
    %1070 = vsyncpa [#allocation3], 1
    %1071 = vsyncpa [#allocation6], 1
    %1072 = vsyncpa [#allocation4], 1

</llo_original>
